<compile_context>
chip_gen: v7x
topology: tpu7x:2x2x1
jax: 0.10.0
libtpu: 0.0.40
codegen_flags: <defaults>
</compile_context>

<pallas_src>
import functools

import jax
import jax.numpy as jnp
import numpy as np
from jax.experimental import pallas as pl
from jax.experimental.pallas import tpu as pltpu

_SUBLANE = 8  # vreg sublane count (f32)


def _round_up(x, m):
    return ((x + m - 1) // m) * m


def _device_kind():
    try:
        return jax.local_devices()[0].device_kind.lower()
    except Exception:  # e.g. interpret mode / no TPU visible at trace time
        return ""


def _make_encoder_kernel(num_linear):
    """Kernel: whole MLP for one batch tile, entirely resident in VMEM (f32)."""

    def kernel(*refs):
        x_ref = refs[0]
        o_ref = refs[-1]
        wb = refs[1:-1]  # w0, b0, w1, b1, ...
        h = x_ref[...]
        for li in range(num_linear):
            w = wb[2 * li][...]
            b = wb[2 * li + 1][...]
            h = jnp.dot(h, w, preferred_element_type=jnp.float32) + b
            if li < num_linear - 1:
                h = jnp.maximum(h, 0.0)  # hidden layers: ReLU (VPU)
            else:
                h = jnp.tanh(h)          # output layer: Tanh (EUP)
        o_ref[...] = h

    return kernel


@functools.partial(jax.jit, static_argnames=("block_b",))
def encoder_forward(x, params, block_b=4096):
    """Run the encoder MLP with a Pallas kernel, tiled over the batch dim."""
    num_linear = len(params)
    batch, in_features = x.shape
    latent_features = params[-1][0].shape[1]

    kind = _device_kind()
    is_v7 = "v7" in kind
    vmem_limit = (48 if is_v7 else 96) * 1024 * 1024

    # ---- batch tile / grid selection (balanced, 8-row aligned) -------------
    block_b = max(_SUBLANE, _round_up(block_b, _SUBLANE))
    rb = _round_up(batch, _SUBLANE)
    grid_n = max(1, (rb + block_b - 1) // block_b)
    # Only on v7x (2 TensorCores) prefer an even number of grid steps so the
    # "parallel" axis gives both cores equal work.
    if is_v7 and grid_n % 2 == 1 and rb >= 2 * _SUBLANE:
        grid_n += 1
    bb = _round_up((rb + grid_n - 1) // grid_n, _SUBLANE)
    padded_b = bb * grid_n

    xp = x.astype(jnp.float32)
    if padded_b != batch:
        xp = jnp.pad(xp, ((0, padded_b - batch), (0, 0)))

    def x_map(i):
        return (i, 0)

    def const_map(i):  # weights/biases: same (only) block for every grid step
        return (0, 0)

    flat_params = []
    in_specs = [pl.BlockSpec((bb, in_features), x_map)]
    for (w, b) in params:
        w = jnp.asarray(w, jnp.float32)
        b = jnp.asarray(b, jnp.float32).reshape(1, -1)
        flat_params += [w, b]
        in_specs += [pl.BlockSpec(w.shape, const_map),
                     pl.BlockSpec(b.shape, const_map)]

    out = pl.pallas_call(
        _make_encoder_kernel(num_linear),
        out_shape=jax.ShapeDtypeStruct((padded_b, latent_features), jnp.float32),
        grid_spec=pltpu.PrefetchScalarGridSpec(
            num_scalar_prefetch=0,
            grid=(grid_n,),
            in_specs=in_specs,
            out_specs=pl.BlockSpec((bb, latent_features), x_map),
        ),
        compiler_params=pltpu.CompilerParams(
            dimension_semantics=("parallel",),
            vmem_limit_bytes=vmem_limit,
        ),
    )(xp, *flat_params)

    if padded_b != batch:
        out = out[:batch]
    return out


def init_encoder_params(key, in_features, latent_features=5,
                        coder_layers=3, coder_width=32):
    """Deterministic init mimicking torch.nn.Linear's uniform(-1/sqrt(fan_in))."""
    dims = [in_features] + [coder_width] * coder_layers + [latent_features]
    params = []
    for fan_in, fan_out in zip(dims[:-1], dims[1:]):
        key, kw, kb = jax.random.split(key, 3)
        bound = 1.0 / np.sqrt(fan_in)
        w = jax.random.uniform(kw, (fan_in, fan_out), jnp.float32, -bound, bound)
        b = jax.random.uniform(kb, (1, fan_out), jnp.float32, -bound, bound)
        params.append((w, b))
    return params


def encoder_reference(x, params):
    """Plain-JAX reference for correctness checking."""
    h = x.astype(jnp.float32)
    for li, (w, b) in enumerate(params):
        h = h @ w + b
        if li < len(params) - 1:
            h = jnp.maximum(h, 0.0)
        else:
            h = jnp.tanh(h)
    return h


if __name__ == "__main__":
    key = jax.random.PRNGKey(0)
    key, kx1, kx2, kx3 = jax.random.split(key, 4)

    in_features = 16
    latent_features = 5
    coder_layers = 3
    coder_width = 32

    params = init_encoder_params(key, in_features, latent_features,
                                 coder_layers, coder_width)

    # Small demo batch (single grid step on 1-TC chips).
    x_small = jax.random.normal(kx1, (8, in_features), jnp.float32)
    out_small = jax.block_until_ready(encoder_forward(x_small, params))
    ref_small = encoder_reference(x_small, params)
    np.testing.assert_allclose(np.asarray(out_small), np.asarray(ref_small),
                               rtol=1e-5, atol=1e-5)
    assert out_small.shape == (8, latent_features)

    # Non-multiple-of-8 batch: exercises batch padding.
    x_mid = jax.random.normal(kx2, (200, in_features), jnp.float32)
    out_mid = jax.block_until_ready(encoder_forward(x_mid, params))
    ref_mid = encoder_reference(x_mid, params)
    np.testing.assert_allclose(np.asarray(out_mid), np.asarray(ref_mid),
                               rtol=1e-5, atol=1e-5)
    assert out_mid.shape == (200, latent_features)

    # Batch just above the tile: exercises balanced multi-step grid.
    x_big = jax.random.normal(kx3, (2049, in_features), jnp.float32)
    out_big = jax.block_until_ready(encoder_forward(x_big, params, block_b=512))
    ref_big = encoder_reference(x_big, params)
    np.testing.assert_allclose(np.asarray(out_big), np.asarray(ref_big),
                               rtol=1e-5, atol=1e-5)
    assert out_big.shape == (2049, latent_features)

    print("KERNEL_OK")
</pallas_src>

<mosaic_0001>
module attributes {stable_mosaic.version = 11 : i64} {
  func.func @kernel(%arg0: i32, %arg1: memref<8x16xf32, #tpu.memory_space<vmem>>, %arg2: memref<16x32xf32, #tpu.memory_space<vmem>>, %arg3: memref<1x32xf32, #tpu.memory_space<vmem>>, %arg4: memref<32x32xf32, #tpu.memory_space<vmem>>, %arg5: memref<1x32xf32, #tpu.memory_space<vmem>>, %arg6: memref<32x32xf32, #tpu.memory_space<vmem>>, %arg7: memref<1x32xf32, #tpu.memory_space<vmem>>, %arg8: memref<32x5xf32, #tpu.memory_space<vmem>>, %arg9: memref<1x5xf32, #tpu.memory_space<vmem>>, %arg10: memref<8x5xf32, #tpu.memory_space<vmem>>) attributes {dimension_semantics = [#tpu.dimension_semantics<parallel>], iteration_bounds = array<i64: 1>, scalar_prefetch = 0 : i64, scratch_operands = 0 : i64, tpu.core_type = #tpu.core_type<tc>, window_params = [{transform_indices = @transform_0, window_bounds = array<i64: 8, 16>}, {pipeline_mode = #tpu.pipeline_mode<synchronous>, transform_indices = @transform_1, window_bounds = array<i64: 16, 32>}, {pipeline_mode = #tpu.pipeline_mode<synchronous>, transform_indices = @transform_2, window_bounds = array<i64: 1, 32>}, {pipeline_mode = #tpu.pipeline_mode<synchronous>, transform_indices = @transform_3, window_bounds = array<i64: 32, 32>}, {pipeline_mode = #tpu.pipeline_mode<synchronous>, transform_indices = @transform_4, window_bounds = array<i64: 1, 32>}, {pipeline_mode = #tpu.pipeline_mode<synchronous>, transform_indices = @transform_5, window_bounds = array<i64: 32, 32>}, {pipeline_mode = #tpu.pipeline_mode<synchronous>, transform_indices = @transform_6, window_bounds = array<i64: 1, 32>}, {pipeline_mode = #tpu.pipeline_mode<synchronous>, transform_indices = @transform_7, window_bounds = array<i64: 32, 5>}, {pipeline_mode = #tpu.pipeline_mode<synchronous>, transform_indices = @transform_8, window_bounds = array<i64: 1, 5>}, {transform_indices = @transform_9, window_bounds = array<i64: 8, 5>}]} {
    %c0 = arith.constant 0 : index
    %c0_0 = arith.constant 0 : index
    %0 = vector.load %arg1[%c0, %c0_0] : memref<8x16xf32, #tpu.memory_space<vmem>>, vector<8x16xf32>
    %c0_1 = arith.constant 0 : index
    %c0_2 = arith.constant 0 : index
    %1 = vector.load %arg2[%c0_1, %c0_2] : memref<16x32xf32, #tpu.memory_space<vmem>>, vector<16x32xf32>
    %c0_3 = arith.constant 0 : index
    %c0_4 = arith.constant 0 : index
    %2 = vector.load %arg3[%c0_3, %c0_4] : memref<1x32xf32, #tpu.memory_space<vmem>>, vector<1x32xf32>
    %cst = arith.constant dense<0.000000e+00> : vector<8x32xf32>
    %3 = tpu.matmul %0, %1, %cst {dimension_numbers = #tpu.dot_dimension_numbers<[1], [0], [0], [1], [0, 0, 1, 1], [], []>} : vector<8x16xf32>, vector<16x32xf32>, vector<8x32xf32> -> vector<8x32xf32>
    %4 = vector.broadcast %2 : vector<1x32xf32> to vector<8x32xf32>
    %5 = arith.addf %3, %4 : vector<8x32xf32>
    %cst_5 = arith.constant 0.000000e+00 : f32
    %6 = vector.broadcast %cst_5 : f32 to vector<8x32xf32>
    %7 = arith.maximumf %5, %6 : vector<8x32xf32>
    %c0_6 = arith.constant 0 : index
    %c0_7 = arith.constant 0 : index
    %8 = vector.load %arg4[%c0_6, %c0_7] : memref<32x32xf32, #tpu.memory_space<vmem>>, vector<32x32xf32>
    %c0_8 = arith.constant 0 : index
    %c0_9 = arith.constant 0 : index
    %9 = vector.load %arg5[%c0_8, %c0_9] : memref<1x32xf32, #tpu.memory_space<vmem>>, vector<1x32xf32>
    %cst_10 = arith.constant dense<0.000000e+00> : vector<8x32xf32>
    %10 = tpu.matmul %7, %8, %cst_10 {dimension_numbers = #tpu.dot_dimension_numbers<[1], [0], [0], [1], [0, 0, 1, 1], [], []>} : vector<8x32xf32>, vector<32x32xf32>, vector<8x32xf32> -> vector<8x32xf32>
    %11 = vector.broadcast %9 : vector<1x32xf32> to vector<8x32xf32>
    %12 = arith.addf %10, %11 : vector<8x32xf32>
    %cst_11 = arith.constant 0.000000e+00 : f32
    %13 = vector.broadcast %cst_11 : f32 to vector<8x32xf32>
    %14 = arith.maximumf %12, %13 : vector<8x32xf32>
    %c0_12 = arith.constant 0 : index
    %c0_13 = arith.constant 0 : index
    %15 = vector.load %arg6[%c0_12, %c0_13] : memref<32x32xf32, #tpu.memory_space<vmem>>, vector<32x32xf32>
    %c0_14 = arith.constant 0 : index
    %c0_15 = arith.constant 0 : index
    %16 = vector.load %arg7[%c0_14, %c0_15] : memref<1x32xf32, #tpu.memory_space<vmem>>, vector<1x32xf32>
    %cst_16 = arith.constant dense<0.000000e+00> : vector<8x32xf32>
    %17 = tpu.matmul %14, %15, %cst_16 {dimension_numbers = #tpu.dot_dimension_numbers<[1], [0], [0], [1], [0, 0, 1, 1], [], []>} : vector<8x32xf32>, vector<32x32xf32>, vector<8x32xf32> -> vector<8x32xf32>
    %18 = vector.broadcast %16 : vector<1x32xf32> to vector<8x32xf32>
    %19 = arith.addf %17, %18 : vector<8x32xf32>
    %cst_17 = arith.constant 0.000000e+00 : f32
    %20 = vector.broadcast %cst_17 : f32 to vector<8x32xf32>
    %21 = arith.maximumf %19, %20 : vector<8x32xf32>
    %c0_18 = arith.constant 0 : index
    %c0_19 = arith.constant 0 : index
    %22 = vector.load %arg8[%c0_18, %c0_19] : memref<32x5xf32, #tpu.memory_space<vmem>>, vector<32x5xf32>
    %c0_20 = arith.constant 0 : index
    %c0_21 = arith.constant 0 : index
    %23 = vector.load %arg9[%c0_20, %c0_21] : memref<1x5xf32, #tpu.memory_space<vmem>>, vector<1x5xf32>
    %cst_22 = arith.constant dense<0.000000e+00> : vector<8x5xf32>
    %24 = tpu.matmul %21, %22, %cst_22 {dimension_numbers = #tpu.dot_dimension_numbers<[1], [0], [0], [1], [0, 0, 1, 1], [], []>} : vector<8x32xf32>, vector<32x5xf32>, vector<8x5xf32> -> vector<8x5xf32>
    %25 = vector.broadcast %23 : vector<1x5xf32> to vector<8x5xf32>
    %26 = arith.addf %24, %25 : vector<8x5xf32>
    %27 = math.tanh %26 : vector<8x5xf32>
    %c0_23 = arith.constant 0 : index
    %c0_24 = arith.constant 0 : index
    %28 = vector.load %arg10[%c0_23, %c0_24] : memref<8x5xf32, #tpu.memory_space<vmem>>, vector<8x5xf32>
    tpu.vector_store %arg10[%c0_23, %c0_24], %27 {strides = array<i32>} : memref<8x5xf32, #tpu.memory_space<vmem>>, vector<8x5xf32>,
    return
  }
  func.func @transform_0(%arg0: i32) -> (i32, i32) {
    %c0_i32 = arith.constant 0 : i32
    %c0_i32_0 = arith.constant 0 : i32
    return %arg0, %c0_i32 : i32, i32
  }
  func.func @transform_1(%arg0: i32) -> (i32, i32) {
    %c0_i32 = arith.constant 0 : i32
    %c0_i32_0 = arith.constant 0 : i32
    %c0_i32_1 = arith.constant 0 : i32
    return %c0_i32, %c0_i32_0 : i32, i32
  }
  func.func @transform_2(%arg0: i32) -> (i32, i32) {
    %c0_i32 = arith.constant 0 : i32
    %c0_i32_0 = arith.constant 0 : i32
    %c0_i32_1 = arith.constant 0 : i32
    return %c0_i32, %c0_i32_0 : i32, i32
  }
  func.func @transform_3(%arg0: i32) -> (i32, i32) {
    %c0_i32 = arith.constant 0 : i32
    %c0_i32_0 = arith.constant 0 : i32
    %c0_i32_1 = arith.constant 0 : i32
    return %c0_i32, %c0_i32_0 : i32, i32
  }
  func.func @transform_4(%arg0: i32) -> (i32, i32) {
    %c0_i32 = arith.constant 0 : i32
    %c0_i32_0 = arith.constant 0 : i32
    %c0_i32_1 = arith.constant 0 : i32
    return %c0_i32, %c0_i32_0 : i32, i32
  }
  func.func @transform_5(%arg0: i32) -> (i32, i32) {
    %c0_i32 = arith.constant 0 : i32
    %c0_i32_0 = arith.constant 0 : i32
    %c0_i32_1 = arith.constant 0 : i32
    return %c0_i32, %c0_i32_0 : i32, i32
  }
  func.func @transform_6(%arg0: i32) -> (i32, i32) {
    %c0_i32 = arith.constant 0 : i32
    %c0_i32_0 = arith.constant 0 : i32
    %c0_i32_1 = arith.constant 0 : i32
    return %c0_i32, %c0_i32_0 : i32, i32
  }
  func.func @transform_7(%arg0: i32) -> (i32, i32) {
    %c0_i32 = arith.constant 0 : i32
    %c0_i32_0 = arith.constant 0 : i32
    %c0_i32_1 = arith.constant 0 : i32
    return %c0_i32, %c0_i32_0 : i32, i32
  }
  func.func @transform_8(%arg0: i32) -> (i32, i32) {
    %c0_i32 = arith.constant 0 : i32
    %c0_i32_0 = arith.constant 0 : i32
    %c0_i32_1 = arith.constant 0 : i32
    return %c0_i32, %c0_i32_0 : i32, i32
  }
  func.func @transform_9(%arg0: i32) -> (i32, i32) {
    %c0_i32 = arith.constant 0 : i32
    %c0_i32_0 = arith.constant 0 : i32
    return %arg0, %c0_i32 : i32, i32
  }
}

</mosaic_0001>

<llo_original>
// kernel: encoder_forward.1
$region0: #{encoder_forward.1}
  #allocation0 [shape = 'u32[]', space=smem, size = 0x4, offset = 0x4, fixed_abs, tag = 'smem constant byte address 0x4 - core index']
  #allocation1 [shape = 'u32[144,128]{1,0:T(1,128)}', space=vmem, size = 0x12000, scoped, tag = 'internal scratch']
  %s0 = inlined_call_operand.hbm [shape: f32[8,16], index: 0, kind: input, shape index: {}]
  %s1 = inlined_call_operand.hbm [shape: f32[16,32], index: 1, kind: input, shape index: {}]
  %s2 = inlined_call_operand.hbm [shape: f32[1,32], index: 2, kind: input, shape index: {}]
  %s3 = inlined_call_operand.hbm [shape: f32[32,32], index: 3, kind: input, shape index: {}]
  %s4 = inlined_call_operand.hbm [shape: f32[1,32], index: 4, kind: input, shape index: {}]
  %s5 = inlined_call_operand.hbm [shape: f32[32,32], index: 5, kind: input, shape index: {}]
  %s6 = inlined_call_operand.hbm [shape: f32[1,32], index: 6, kind: input, shape index: {}]
  %s7 = inlined_call_operand.hbm [shape: f32[32,5], index: 7, kind: input, shape index: {}]
  %s8 = inlined_call_operand.hbm [shape: f32[1,5], index: 8, kind: input, shape index: {}]
  %s9 = inlined_call_operand.hbm [shape: f32[8,5], index: 9, kind: output, shape index: {}]
  %s10 = sld [smem:[#allocation0]]
  $region82: #{encoder_forward.1} parent=0
    _
  %s12 = ssub.s32 1, %s10
  %s13 = scalar_select 0, %s12, %s10
  $region1: #{encoder_forward.1} parent=0
    #allocation2 [shape = 'u8[4096]{0}', space=vmem, size = 0x1000, scoped, tag = 'input window, operand 0, single buffered']
    #allocation3 [shape = 's32[1]{0}', space=sflag, size = 0x4, scoped, tag = 'scoped memory for encoder_forward.1']
    #allocation4 [shape = 's32[1]{0}', space=sflag, size = 0x4, scoped, tag = 'scoped memory for encoder_forward.1']
    #allocation5 [shape = 'u8[8192]{0}', space=vmem, size = 0x2000, scoped, tag = 'input window, operand 1, single buffered']
    #allocation6 [shape = 's32[1]{0}', space=sflag, size = 0x4, scoped, tag = 'scoped memory for encoder_forward.1']
    #allocation7 [shape = 'u8[512]{0}', space=vmem, size = 0x400, scoped, tag = 'input window, operand 2, single buffered']
    #allocation8 [shape = 'u8[16384]{0}', space=vmem, size = 0x4000, scoped, tag = 'input window, operand 3, single buffered']
    #allocation9 [shape = 's32[1]{0}', space=sflag, size = 0x4, scoped, tag = 'scoped memory for encoder_forward.1']
    #allocation10 [shape = 'u8[512]{0}', space=vmem, size = 0x400, scoped, tag = 'input window, operand 4, single buffered']
    #allocation11 [shape = 'u8[16384]{0}', space=vmem, size = 0x4000, scoped, tag = 'input window, operand 5, single buffered']
    #allocation12 [shape = 's32[1]{0}', space=sflag, size = 0x4, scoped, tag = 'scoped memory for encoder_forward.1']
    #allocation13 [shape = 'u8[512]{0}', space=vmem, size = 0x400, scoped, tag = 'input window, operand 6, single buffered']
    #allocation14 [shape = 'u8[16384]{0}', space=vmem, size = 0x4000, scoped, tag = 'input window, operand 7, single buffered']
    #allocation15 [shape = 's32[1]{0}', space=sflag, size = 0x4, scoped, tag = 'scoped memory for encoder_forward.1']
    #allocation16 [shape = 'u8[512]{0}', space=vmem, size = 0x400, scoped, tag = 'input window, operand 8, single buffered']
    #allocation17 [shape = 'u8[4096]{0}', space=vmem, size = 0x1000, scoped, tag = 'output window, operand 0, single buffered']
    %14 = vsyncpa [#allocation3], 0
    %15 = vsyncpa [#allocation6], 0
    %16 = vsyncpa [#allocation9], 0
    %17 = vsyncpa [#allocation12], 0
    %18 = vsyncpa [#allocation15], 0
    %19 = vsyncpa [#allocation4], 0
    // Predicated region
    $region2: #{encoder_forward.1} parent=1 // pred_check
      _
    $region3: #{encoder_forward.1} parent=1 // pred_check_branch
      %21 = sbr.rel (0) target = $region5
    $region4: #{encoder_forward.1} parent=1 // pred_region
      %s23 = ssub.s32 128, 128
      %24 = vsyncadd [#allocation3], %s23
      %s26 = sshll.u32 [#allocation2], 4
      %s27 = int_to_ptr.vmem [resolvable:$true] %s26
      %29 = dma.hbm_to_vmem [thread:$0]  %s0, 128, %s27, [#allocation3]
    $region5: #{encoder_forward.1} parent=1 // pred_fallthru
      _
    // Predicated region
    $region6: #{encoder_forward.1} parent=1 // pred_check
      _
    $region7: #{encoder_forward.1} parent=1 // pred_check_branch
      %31 = sbr.rel (0) target = $region9
    $region8: #{encoder_forward.1} parent=1 // pred_region
      %s33 = ssub.s32 256, 256
      %34 = vsyncadd [#allocation6], %s33
      %s35 = sshll.u32 [#allocation5], 4
      %s36 = int_to_ptr.vmem [resolvable:$true] %s35
      %41 = dma.hbm_to_vmem [thread:$0]  %s1, 256, %s36, [#allocation6], 128, 128, 8
    $region9: #{encoder_forward.1} parent=1 // pred_fallthru
      _
    // Predicated region
    $region10: #{encoder_forward.1} parent=1 // pred_check
      _
    $region11: #{encoder_forward.1} parent=1 // pred_check_branch
      %43 = sbr.rel (0) target = $region13
    $region12: #{encoder_forward.1} parent=1 // pred_region
      %s45 = ssub.s32 16, 16
      %46 = vsyncadd [#allocation6], %s45
      %s48 = sshll.u32 [#allocation7], 4
      %s49 = int_to_ptr.vmem [resolvable:$true] %s48
      %51 = dma.hbm_to_vmem [thread:$0]  %s2, 16, %s49, [#allocation6]
    $region13: #{encoder_forward.1} parent=1 // pred_fallthru
      _
    // Predicated region
    $region14: #{encoder_forward.1} parent=1 // pred_check
      _
    $region15: #{encoder_forward.1} parent=1 // pred_check_branch
      %53 = sbr.rel (0) target = $region17
    $region16: #{encoder_forward.1} parent=1 // pred_region
      %s55 = ssub.s32 512, 512
      %56 = vsyncadd [#allocation9], %s55
      %s57 = sshll.u32 [#allocation8], 4
      %s58 = int_to_ptr.vmem [resolvable:$true] %s57
      %63 = dma.hbm_to_vmem [thread:$0]  %s3, 512, %s58, [#allocation9], 128, 128, 8
    $region17: #{encoder_forward.1} parent=1 // pred_fallthru
      _
    // Predicated region
    $region18: #{encoder_forward.1} parent=1 // pred_check
      _
    $region19: #{encoder_forward.1} parent=1 // pred_check_branch
      %65 = sbr.rel (0) target = $region21
    $region20: #{encoder_forward.1} parent=1 // pred_region
      %s67 = ssub.s32 16, 16
      %68 = vsyncadd [#allocation9], %s67
      %s70 = sshll.u32 [#allocation10], 4
      %s71 = int_to_ptr.vmem [resolvable:$true] %s70
      %73 = dma.hbm_to_vmem [thread:$0]  %s4, 16, %s71, [#allocation9]
    $region21: #{encoder_forward.1} parent=1 // pred_fallthru
      _
    // Predicated region
    $region22: #{encoder_forward.1} parent=1 // pred_check
      _
    $region23: #{encoder_forward.1} parent=1 // pred_check_branch
      %75 = sbr.rel (0) target = $region25
    $region24: #{encoder_forward.1} parent=1 // pred_region
      %s77 = ssub.s32 512, 512
      %78 = vsyncadd [#allocation12], %s77
      %s79 = sshll.u32 [#allocation11], 4
      %s80 = int_to_ptr.vmem [resolvable:$true] %s79
      %85 = dma.hbm_to_vmem [thread:$0]  %s5, 512, %s80, [#allocation12], 128, 128, 8
    $region25: #{encoder_forward.1} parent=1 // pred_fallthru
      _
    // Predicated region
    $region26: #{encoder_forward.1} parent=1 // pred_check
      _
    $region27: #{encoder_forward.1} parent=1 // pred_check_branch
      %87 = sbr.rel (0) target = $region29
    $region28: #{encoder_forward.1} parent=1 // pred_region
      %s89 = ssub.s32 16, 16
      %90 = vsyncadd [#allocation12], %s89
      %s92 = sshll.u32 [#allocation13], 4
      %s93 = int_to_ptr.vmem [resolvable:$true] %s92
      %95 = dma.hbm_to_vmem [thread:$0]  %s6, 16, %s93, [#allocation12]
    $region29: #{encoder_forward.1} parent=1 // pred_fallthru
      _
    // Predicated region
    $region30: #{encoder_forward.1} parent=1 // pred_check
      _
    $region31: #{encoder_forward.1} parent=1 // pred_check_branch
      %97 = sbr.rel (0) target = $region33
    $region32: #{encoder_forward.1} parent=1 // pred_region
      %s99 = ssub.s32 512, 512
      %100 = vsyncadd [#allocation15], %s99
      %s101 = sshll.u32 [#allocation14], 4
      %s102 = int_to_ptr.vmem [resolvable:$true] %s101
      %107 = dma.hbm_to_vmem [thread:$0]  %s7, 512, %s102, [#allocation15], 128, 128, 8
    $region33: #{encoder_forward.1} parent=1 // pred_fallthru
      _
    // Predicated region
    $region34: #{encoder_forward.1} parent=1 // pred_check
      _
    $region35: #{encoder_forward.1} parent=1 // pred_check_branch
      %109 = sbr.rel (0) target = $region37
    $region36: #{encoder_forward.1} parent=1 // pred_region
      %s111 = ssub.s32 16, 16
      %112 = vsyncadd [#allocation15], %s111
      %s114 = sshll.u32 [#allocation16], 4
      %s115 = int_to_ptr.vmem [resolvable:$true] %s114
      %117 = dma.hbm_to_vmem [thread:$0]  %s8, 16, %s115, [#allocation15]
    $region37: #{encoder_forward.1} parent=1 // pred_fallthru
      _
    // Predicated region
    $region38: #{encoder_forward.1} parent=1 // pred_check
      _
    $region39: #{encoder_forward.1} parent=1 // pred_check_branch
      %119 = sbr.rel (0) target = $region41
    $region40: #{encoder_forward.1} parent=1 // pred_region
      %120 = dma.done [#allocation3], 128
    $region41: #{encoder_forward.1} parent=1 // pred_fallthru
      _
    // Predicated region
    $region42: #{encoder_forward.1} parent=1 // pred_check
      _
    $region43: #{encoder_forward.1} parent=1 // pred_check_branch
      %122 = sbr.rel (0) target = $region45
    $region44: #{encoder_forward.1} parent=1 // pred_region
      %123 = dma.done [#allocation6], 256
    $region45: #{encoder_forward.1} parent=1 // pred_fallthru
      _
    // Predicated region
    $region46: #{encoder_forward.1} parent=1 // pred_check
      _
    $region47: #{encoder_forward.1} parent=1 // pred_check_branch
      %125 = sbr.rel (0) target = $region49
    $region48: #{encoder_forward.1} parent=1 // pred_region
      %126 = dma.done [#allocation6], 16
    $region49: #{encoder_forward.1} parent=1 // pred_fallthru
      _
    // Predicated region
    $region50: #{encoder_forward.1} parent=1 // pred_check
      _
    $region51: #{encoder_forward.1} parent=1 // pred_check_branch
      %128 = sbr.rel (0) target = $region53
    $region52: #{encoder_forward.1} parent=1 // pred_region
      %129 = dma.done [#allocation9], 512
    $region53: #{encoder_forward.1} parent=1 // pred_fallthru
      _
    // Predicated region
    $region54: #{encoder_forward.1} parent=1 // pred_check
      _
    $region55: #{encoder_forward.1} parent=1 // pred_check_branch
      %131 = sbr.rel (0) target = $region57
    $region56: #{encoder_forward.1} parent=1 // pred_region
      %132 = dma.done [#allocation9], 16
    $region57: #{encoder_forward.1} parent=1 // pred_fallthru
      _
    // Predicated region
    $region58: #{encoder_forward.1} parent=1 // pred_check
      _
    $region59: #{encoder_forward.1} parent=1 // pred_check_branch
      %134 = sbr.rel (0) target = $region61
    $region60: #{encoder_forward.1} parent=1 // pred_region
      %135 = dma.done [#allocation12], 512
    $region61: #{encoder_forward.1} parent=1 // pred_fallthru
      _
    // Predicated region
    $region62: #{encoder_forward.1} parent=1 // pred_check
      _
    $region63: #{encoder_forward.1} parent=1 // pred_check_branch
      %137 = sbr.rel (0) target = $region65
    $region64: #{encoder_forward.1} parent=1 // pred_region
      %138 = dma.done [#allocation12], 16
    $region65: #{encoder_forward.1} parent=1 // pred_fallthru
      _
    // Predicated region
    $region66: #{encoder_forward.1} parent=1 // pred_check
      _
    $region67: #{encoder_forward.1} parent=1 // pred_check_branch
      %140 = sbr.rel (0) target = $region69
    $region68: #{encoder_forward.1} parent=1 // pred_region
      %141 = dma.done [#allocation15], 512
    $region69: #{encoder_forward.1} parent=1 // pred_fallthru
      _
    // Predicated region
    $region70: #{encoder_forward.1} parent=1 // pred_check
      _
    $region71: #{encoder_forward.1} parent=1 // pred_check_branch
      %143 = sbr.rel (0) target = $region73
    $region72: #{encoder_forward.1} parent=1 // pred_region
      %144 = dma.done [#allocation15], 16
    $region73: #{encoder_forward.1} parent=1 // pred_fallthru
      _
    %v145 = vld [vmem:[#allocation2] sm:$0xff]
    %v146 = vld [vmem:[#allocation5] sm:$0xff]
    %v147 = vld [vmem:[#allocation5 + $0x8] sm:$0xff]
    %v148 = vld [vmem:[#allocation7] sm:$0x1]
    %v150 = vlaneseq
    %v151 = vshrl.u32 %v150, 7
    %v152 = vsub.s32 0, %v151
    %v153 = vrot.slane %v148, %v152
    %vm155 = vcmask 130048
    %v157 = vsel %vm155, %v145, 0
    %159 = vmatprep.subr.mxu0 0.0
    %160 = vmatpush1.msra.mxu0 %v146
    %161 = vmatprep.subr.mxu0 0.0
    %162 = vmatpush1.msra.mxu0 %v147
    %163 = vmatprep.subr.mxu0 0.0
    %164 = vmatpush1.msra.mxu0 0.0
    %165 = vmatprep.subr.mxu0 0.0
    %166 = vmatpush1.msra.mxu0 0.0
    %167 = vmatprep.subr.mxu0 0.0
    %168 = vmatpush1.msra.mxu0 0.0
    %169 = vmatprep.subr.mxu0 0.0
    %170 = vmatpush1.msra.mxu0 0.0
    %171 = vmatprep.subr.mxu0 0.0
    %172 = vmatpush1.msra.mxu0 0.0
    %173 = vmatprep.subr.mxu0 0.0
    %174 = vmatpush1.msra.mxu0 0.0
    %175 = vmatprep.subr.mxu0 0.0
    %176 = vmatpush1.msra.mxu0 0.0
    %177 = vmatprep.subr.mxu0 0.0
    %178 = vmatpush1.msra.mxu0 0.0
    %179 = vmatprep.subr.mxu0 0.0
    %180 = vmatpush1.msra.mxu0 0.0
    %181 = vmatprep.subr.mxu0 0.0
    %182 = vmatpush1.msra.mxu0 0.0
    %183 = vmatprep.subr.mxu0 0.0
    %184 = vmatpush1.msra.mxu0 0.0
    %185 = vmatprep.subr.mxu0 0.0
    %186 = vmatpush1.msra.mxu0 0.0
    %187 = vmatprep.subr.mxu0 0.0
    %188 = vmatpush1.msra.mxu0 0.0
    %189 = vmatprep.subr.mxu0 0.0
    %190 = vmatpush1.msra.mxu0 0.0
    %191 = vmatprep.subr.mxu0 0.0
    %192 = vmatpush1.msra.mxu0 0.0
    %193 = vmatprep.subr.mxu0 0.0
    %194 = vmatpush1.msra.mxu0 0.0
    %195 = vmatprep.subr.mxu0 0.0
    %196 = vmatpush1.msra.mxu0 0.0
    %197 = vmatprep.subr.mxu0 0.0
    %198 = vmatpush1.msra.mxu0 0.0
    %199 = vmatprep.subr.mxu0 0.0
    %200 = vmatpush1.msra.mxu0 0.0
    %201 = vmatprep.subr.mxu0 0.0
    %202 = vmatpush1.msra.mxu0 0.0
    %203 = vmatprep.subr.mxu0 0.0
    %204 = vmatpush1.msra.mxu0 0.0
    %205 = vmatprep.subr.mxu0 0.0
    %206 = vmatpush1.msra.mxu0 0.0
    %207 = vmatprep.subr.mxu0 0.0
    %208 = vmatpush1.msra.mxu0 0.0
    %209 = vmatprep.subr.mxu0 0.0
    %210 = vmatpush1.msra.mxu0 0.0
    %211 = vmatprep.subr.mxu0 0.0
    %212 = vmatpush1.msra.mxu0 0.0
    %213 = vmatprep.subr.mxu0 0.0
    %214 = vmatpush1.msra.mxu0 0.0
    %215 = vmatprep.subr.mxu0 0.0
    %216 = vmatpush1.msra.mxu0 0.0
    %217 = vmatprep.subr.mxu0 0.0
    %218 = vmatpush1.msra.mxu0 0.0
    %219 = vmatprep.subr.mxu0 0.0
    %220 = vmatpush1.msra.mxu0 0.0
    %221 = vmatprep.subr.mxu0 0.0
    %222 = vmatpush1.msra.mxu0 0.0
    %223 = vmatprep.mubr.f32.mxu0 0.0
    %224 = vmatmul.mubr.f32.gmra.mrb[0].mxu0 %v157
    %v225 = vpop.f32.mrb[0].mxu0
    %v226 = vadd.f32 %v153, %v225
    %v227 = vpop.f32.mrb[0].mxu0
    %228 = vdwg.mxu0
    %v229 = vmax.f32 %v226, 0.0
    %v230 = vld [vmem:[#allocation8] sm:$0xff]
    %v231 = vld [vmem:[#allocation8 + $0x8] sm:$0xff]
    %v232 = vld [vmem:[#allocation8 + $0x10] sm:$0xff]
    %v233 = vld [vmem:[#allocation8 + $0x18] sm:$0xff]
    %v234 = vld [vmem:[#allocation10] sm:$0x1]
    %v236 = vlaneseq
    %v237 = vshrl.u32 %v236, 7
    %v238 = vsub.s32 0, %v237
    %v239 = vrot.slane %v234, %v238
    %vm241 = vcmask 261120
    %v243 = vsel %vm241, %v229, 0
    %245 = vmatprep.subr.mxu0 0.0
    %246 = vmatpush1.msra.mxu0 %v230
    %247 = vmatprep.subr.mxu0 0.0
    %248 = vmatpush1.msra.mxu0 %v231
    %249 = vmatprep.subr.mxu0 0.0
    %250 = vmatpush1.msra.mxu0 %v232
    %251 = vmatprep.subr.mxu0 0.0
    %252 = vmatpush1.msra.mxu0 %v233
    %253 = vmatprep.subr.mxu0 0.0
    %254 = vmatpush1.msra.mxu0 0.0
    %255 = vmatprep.subr.mxu0 0.0
    %256 = vmatpush1.msra.mxu0 0.0
    %257 = vmatprep.subr.mxu0 0.0
    %258 = vmatpush1.msra.mxu0 0.0
    %259 = vmatprep.subr.mxu0 0.0
    %260 = vmatpush1.msra.mxu0 0.0
    %261 = vmatprep.subr.mxu0 0.0
    %262 = vmatpush1.msra.mxu0 0.0
    %263 = vmatprep.subr.mxu0 0.0
    %264 = vmatpush1.msra.mxu0 0.0
    %265 = vmatprep.subr.mxu0 0.0
    %266 = vmatpush1.msra.mxu0 0.0
    %267 = vmatprep.subr.mxu0 0.0
    %268 = vmatpush1.msra.mxu0 0.0
    %269 = vmatprep.subr.mxu0 0.0
    %270 = vmatpush1.msra.mxu0 0.0
    %271 = vmatprep.subr.mxu0 0.0
    %272 = vmatpush1.msra.mxu0 0.0
    %273 = vmatprep.subr.mxu0 0.0
    %274 = vmatpush1.msra.mxu0 0.0
    %275 = vmatprep.subr.mxu0 0.0
    %276 = vmatpush1.msra.mxu0 0.0
    %277 = vmatprep.subr.mxu0 0.0
    %278 = vmatpush1.msra.mxu0 0.0
    %279 = vmatprep.subr.mxu0 0.0
    %280 = vmatpush1.msra.mxu0 0.0
    %281 = vmatprep.subr.mxu0 0.0
    %282 = vmatpush1.msra.mxu0 0.0
    %283 = vmatprep.subr.mxu0 0.0
    %284 = vmatpush1.msra.mxu0 0.0
    %285 = vmatprep.subr.mxu0 0.0
    %286 = vmatpush1.msra.mxu0 0.0
    %287 = vmatprep.subr.mxu0 0.0
    %288 = vmatpush1.msra.mxu0 0.0
    %289 = vmatprep.subr.mxu0 0.0
    %290 = vmatpush1.msra.mxu0 0.0
    %291 = vmatprep.subr.mxu0 0.0
    %292 = vmatpush1.msra.mxu0 0.0
    %293 = vmatprep.subr.mxu0 0.0
    %294 = vmatpush1.msra.mxu0 0.0
    %295 = vmatprep.subr.mxu0 0.0
    %296 = vmatpush1.msra.mxu0 0.0
    %297 = vmatprep.subr.mxu0 0.0
    %298 = vmatpush1.msra.mxu0 0.0
    %299 = vmatprep.subr.mxu0 0.0
    %300 = vmatpush1.msra.mxu0 0.0
    %301 = vmatprep.subr.mxu0 0.0
    %302 = vmatpush1.msra.mxu0 0.0
    %303 = vmatprep.subr.mxu0 0.0
    %304 = vmatpush1.msra.mxu0 0.0
    %305 = vmatprep.subr.mxu0 0.0
    %306 = vmatpush1.msra.mxu0 0.0
    %307 = vmatprep.subr.mxu0 0.0
    %308 = vmatpush1.msra.mxu0 0.0
    %309 = vmatprep.mubr.f32.mxu0 0.0
    %310 = vmatmul.mubr.f32.gmra.mrb[0].mxu0 %v243
    %v311 = vpop.f32.mrb[0].mxu0
    %v312 = vadd.f32 %v239, %v311
    %v313 = vpop.f32.mrb[0].mxu0
    %314 = vdwg.mxu0
    %v315 = vmax.f32 %v312, 0.0
    %v316 = vld [vmem:[#allocation11] sm:$0xff]
    %v317 = vld [vmem:[#allocation11 + $0x8] sm:$0xff]
    %v318 = vld [vmem:[#allocation11 + $0x10] sm:$0xff]
    %v319 = vld [vmem:[#allocation11 + $0x18] sm:$0xff]
    %v320 = vld [vmem:[#allocation13] sm:$0x1]
    %v322 = vlaneseq
    %v323 = vshrl.u32 %v322, 7
    %v324 = vsub.s32 0, %v323
    %v325 = vrot.slane %v320, %v324
    %v328 = vsel %vm241, %v315, 0
    %330 = vmatprep.subr.mxu0 0.0
    %331 = vmatpush1.msra.mxu0 %v316
    %332 = vmatprep.subr.mxu0 0.0
    %333 = vmatpush1.msra.mxu0 %v317
    %334 = vmatprep.subr.mxu0 0.0
    %335 = vmatpush1.msra.mxu0 %v318
    %336 = vmatprep.subr.mxu0 0.0
    %337 = vmatpush1.msra.mxu0 %v319
    %338 = vmatprep.subr.mxu0 0.0
    %339 = vmatpush1.msra.mxu0 0.0
    %340 = vmatprep.subr.mxu0 0.0
    %341 = vmatpush1.msra.mxu0 0.0
    %342 = vmatprep.subr.mxu0 0.0
    %343 = vmatpush1.msra.mxu0 0.0
    %344 = vmatprep.subr.mxu0 0.0
    %345 = vmatpush1.msra.mxu0 0.0
    %346 = vmatprep.subr.mxu0 0.0
    %347 = vmatpush1.msra.mxu0 0.0
    %348 = vmatprep.subr.mxu0 0.0
    %349 = vmatpush1.msra.mxu0 0.0
    %350 = vmatprep.subr.mxu0 0.0
    %351 = vmatpush1.msra.mxu0 0.0
    %352 = vmatprep.subr.mxu0 0.0
    %353 = vmatpush1.msra.mxu0 0.0
    %354 = vmatprep.subr.mxu0 0.0
    %355 = vmatpush1.msra.mxu0 0.0
    %356 = vmatprep.subr.mxu0 0.0
    %357 = vmatpush1.msra.mxu0 0.0
    %358 = vmatprep.subr.mxu0 0.0
    %359 = vmatpush1.msra.mxu0 0.0
    %360 = vmatprep.subr.mxu0 0.0
    %361 = vmatpush1.msra.mxu0 0.0
    %362 = vmatprep.subr.mxu0 0.0
    %363 = vmatpush1.msra.mxu0 0.0
    %364 = vmatprep.subr.mxu0 0.0
    %365 = vmatpush1.msra.mxu0 0.0
    %366 = vmatprep.subr.mxu0 0.0
    %367 = vmatpush1.msra.mxu0 0.0
    %368 = vmatprep.subr.mxu0 0.0
    %369 = vmatpush1.msra.mxu0 0.0
    %370 = vmatprep.subr.mxu0 0.0
    %371 = vmatpush1.msra.mxu0 0.0
    %372 = vmatprep.subr.mxu0 0.0
    %373 = vmatpush1.msra.mxu0 0.0
    %374 = vmatprep.subr.mxu0 0.0
    %375 = vmatpush1.msra.mxu0 0.0
    %376 = vmatprep.subr.mxu0 0.0
    %377 = vmatpush1.msra.mxu0 0.0
    %378 = vmatprep.subr.mxu0 0.0
    %379 = vmatpush1.msra.mxu0 0.0
    %380 = vmatprep.subr.mxu0 0.0
    %381 = vmatpush1.msra.mxu0 0.0
    %382 = vmatprep.subr.mxu0 0.0
    %383 = vmatpush1.msra.mxu0 0.0
    %384 = vmatprep.subr.mxu0 0.0
    %385 = vmatpush1.msra.mxu0 0.0
    %386 = vmatprep.subr.mxu0 0.0
    %387 = vmatpush1.msra.mxu0 0.0
    %388 = vmatprep.subr.mxu0 0.0
    %389 = vmatpush1.msra.mxu0 0.0
    %390 = vmatprep.subr.mxu0 0.0
    %391 = vmatpush1.msra.mxu0 0.0
    %392 = vmatprep.subr.mxu0 0.0
    %393 = vmatpush1.msra.mxu0 0.0
    %394 = vmatprep.mubr.f32.mxu0 0.0
    %395 = vmatmul.mubr.f32.gmra.mrb[0].mxu0 %v328
    %v396 = vpop.f32.mrb[0].mxu0
    %v397 = vadd.f32 %v325, %v396
    %v398 = vpop.f32.mrb[0].mxu0
    %399 = vdwg.mxu0
    %v400 = vmax.f32 %v397, 0.0
    %v401 = vld [vmem:[#allocation14] sm:$0xff]
    %v402 = vld [vmem:[#allocation14 + $0x8] sm:$0xff]
    %v403 = vld [vmem:[#allocation14 + $0x10] sm:$0xff]
    %v404 = vld [vmem:[#allocation14 + $0x18] sm:$0xff]
    %v405 = vld [vmem:[#allocation16] sm:$0x1]
    %v407 = vlaneseq
    %v408 = vshrl.u32 %v407, 7
    %v409 = vsub.s32 0, %v408
    %v410 = vrot.slane %v405, %v409
    %v413 = vsel %vm241, %v400, 0
    %415 = vmatprep.subr.mxu0 0.0
    %416 = vmatpush1.msra.mxu0 %v401
    %417 = vmatprep.subr.mxu0 0.0
    %418 = vmatpush1.msra.mxu0 %v402
    %419 = vmatprep.subr.mxu0 0.0
    %420 = vmatpush1.msra.mxu0 %v403
    %421 = vmatprep.subr.mxu0 0.0
    %422 = vmatpush1.msra.mxu0 %v404
    %423 = vmatprep.subr.mxu0 0.0
    %424 = vmatpush1.msra.mxu0 0.0
    %425 = vmatprep.subr.mxu0 0.0
    %426 = vmatpush1.msra.mxu0 0.0
    %427 = vmatprep.subr.mxu0 0.0
    %428 = vmatpush1.msra.mxu0 0.0
    %429 = vmatprep.subr.mxu0 0.0
    %430 = vmatpush1.msra.mxu0 0.0
    %431 = vmatprep.subr.mxu0 0.0
    %432 = vmatpush1.msra.mxu0 0.0
    %433 = vmatprep.subr.mxu0 0.0
    %434 = vmatpush1.msra.mxu0 0.0
    %435 = vmatprep.subr.mxu0 0.0
    %436 = vmatpush1.msra.mxu0 0.0
    %437 = vmatprep.subr.mxu0 0.0
    %438 = vmatpush1.msra.mxu0 0.0
    %439 = vmatprep.subr.mxu0 0.0
    %440 = vmatpush1.msra.mxu0 0.0
    %441 = vmatprep.subr.mxu0 0.0
    %442 = vmatpush1.msra.mxu0 0.0
    %443 = vmatprep.subr.mxu0 0.0
    %444 = vmatpush1.msra.mxu0 0.0
    %445 = vmatprep.subr.mxu0 0.0
    %446 = vmatpush1.msra.mxu0 0.0
    %447 = vmatprep.subr.mxu0 0.0
    %448 = vmatpush1.msra.mxu0 0.0
    %449 = vmatprep.subr.mxu0 0.0
    %450 = vmatpush1.msra.mxu0 0.0
    %451 = vmatprep.subr.mxu0 0.0
    %452 = vmatpush1.msra.mxu0 0.0
    %453 = vmatprep.subr.mxu0 0.0
    %454 = vmatpush1.msra.mxu0 0.0
    %455 = vmatprep.subr.mxu0 0.0
    %456 = vmatpush1.msra.mxu0 0.0
    %457 = vmatprep.subr.mxu0 0.0
    %458 = vmatpush1.msra.mxu0 0.0
    %459 = vmatprep.subr.mxu0 0.0
    %460 = vmatpush1.msra.mxu0 0.0
    %461 = vmatprep.subr.mxu0 0.0
    %462 = vmatpush1.msra.mxu0 0.0
    %463 = vmatprep.subr.mxu0 0.0
    %464 = vmatpush1.msra.mxu0 0.0
    %465 = vmatprep.subr.mxu0 0.0
    %466 = vmatpush1.msra.mxu0 0.0
    %467 = vmatprep.subr.mxu0 0.0
    %468 = vmatpush1.msra.mxu0 0.0
    %469 = vmatprep.subr.mxu0 0.0
    %470 = vmatpush1.msra.mxu0 0.0
    %471 = vmatprep.subr.mxu0 0.0
    %472 = vmatpush1.msra.mxu0 0.0
    %473 = vmatprep.subr.mxu0 0.0
    %474 = vmatpush1.msra.mxu0 0.0
    %475 = vmatprep.subr.mxu0 0.0
    %476 = vmatpush1.msra.mxu0 0.0
    %477 = vmatprep.subr.mxu0 0.0
    %478 = vmatpush1.msra.mxu0 0.0
    %479 = vmatprep.mubr.f32.mxu0 0.0
    %480 = vmatmul.mubr.f32.gmra.mrb[0].mxu0 %v413
    %v481 = vpop.f32.mrb[0].mxu0
    %v482 = vadd.f32 %v410, %v481
    %v483 = vpop.f32.mrb[0].mxu0
    %484 = vdwg.mxu0
    %v485 = vtanh.pop %v482
    %vm486 = vcmask 39936
    %487 = vst.msk [vmem:[#allocation17] sm:$0xff] %vm486, %v485
    // Predicated region
    $region74: #{encoder_forward.1} parent=1 // pred_check
      _
    $region75: #{encoder_forward.1} parent=1 // pred_check_branch
      %489 = sbr.rel (0) target = $region77
    $region76: #{encoder_forward.1} parent=1 // pred_region
      %s491 = ssub.s32 128, 128
      %492 = vsyncadd [#allocation4], %s491
      %s494 = sshll.u32 [#allocation17], 4
      %s495 = int_to_ptr.vmem [resolvable:$true] %s494
      %497 = dma.vmem_to_hbm [thread:$0]  %s495, 128, %s9, [#allocation4]
    $region77: #{encoder_forward.1} parent=1 // pred_fallthru
      _
    // Predicated region
    $region78: #{encoder_forward.1} parent=1 // pred_check
      _
    $region79: #{encoder_forward.1} parent=1 // pred_check_branch
      %499 = sbr.rel (0) target = $region81
    $region80: #{encoder_forward.1} parent=1 // pred_region
      %500 = dma.done [#allocation4], 128
    $region81: #{encoder_forward.1} parent=1 // pred_fallthru
      _
    %501 = vsyncpa [#allocation3], 1
    %502 = vsyncpa [#allocation6], 1
    %503 = vsyncpa [#allocation9], 1
    %504 = vsyncpa [#allocation12], 1
    %505 = vsyncpa [#allocation15], 1
    %506 = vsyncpa [#allocation4], 1

</llo_original>
